<compile_context>
chip_gen: v7x
topology: tpu7x:2x2x1
jax: 0.10.0
libtpu: 0.0.40
codegen_flags: <defaults>
</compile_context>

<pallas_src>
import functools

import jax
import jax.numpy as jnp
from jax import lax
from jax.experimental import pallas as pl
from jax.experimental.pallas import tpu as pltpu


def _round_up(a, m):
    return (a + m - 1) // m * m


def _mixed_matmul_kernel(w_ref, patches_ref, o_ref):
    """One grid step = one lane tile of flattened (batch*H*W) columns.

    w_ref      : VMEM (C_out, Kp)     alpha-mixed [conv taps | bias | pad] (grid-invariant)
    patches_ref: VMEM (Kp, TILE_N)    im2col patches (+ constant-1 bias row)
    o_ref      : VMEM (C_out, TILE_N)
    """
    o_ref[...] = jnp.dot(
        w_ref[...], patches_ref[...], preferred_element_type=jnp.float32
    ).astype(o_ref.dtype)


def mixed_op_forward(x_nchw, op_weights, w_aug, kmax, *,
                     mxu_dtype=jnp.float32, tile_n=512):
    """x_nchw: (B, C_in, H, W) f32; op_weights: (num_branch,) mixing weights;
    w_aug: (num_branch, C_out, Kp) packed branch matrices.
    Returns (B, C_out, H, W) f32."""
    B, C_in, H, W = x_nchw.shape
    num_branch, C_out, Kp = w_aug.shape
    K_raw = kmax * kmax * C_in
    pad = (kmax - 1) // 2
    HW = H * W
    N = B * HW

    # ---- hoisted, grid-invariant branch mix (bias column included) ----
    w_mix = jnp.einsum("b,bok->ok", op_weights.astype(jnp.float32),
                       w_aug.astype(jnp.float32))            # (C_out, Kp), f32 mix

    # ---- layout plumbing / im2col (plain JAX) ----
    # TODO(synk): move im2col on-chip (halo'd strips / per-tap matmuls) at
    # production sizes; here it is a handful of KB.
    x_nhwc = jnp.transpose(x_nchw, (0, 2, 3, 1)).astype(jnp.float32)
    x_p = jnp.pad(x_nhwc, ((0, 0), (pad, pad), (pad, pad), (0, 0)))
    taps = [x_p[:, ky:ky + H, kx:kx + W, :]
            for ky in range(kmax) for kx in range(kmax)]
    patches = jnp.stack(taps, axis=3).reshape(B, HW, K_raw)   # (B, HW, K) order (ky,kx,ci)
    patches = jnp.concatenate(                                 # + bias row + pad to Kp
        [patches,
         jnp.ones((B, HW, 1), jnp.float32),
         jnp.zeros((B, HW, Kp - K_raw - 1), jnp.float32)], axis=2)
    patches = patches.reshape(N, Kp).T                         # (Kp, N): batch folded into lanes

    # ---- lane tiling: columns padded to a multiple of tile_n (>=512, x128) ----
    if N <= tile_n:
        tile_n = _round_up(N, 128)
    else:
        tile_n = _round_up(tile_n, 128)
    n_pad = _round_up(N, tile_n)
    if n_pad > N:
        patches = jnp.pad(patches, ((0, 0), (0, n_pad - N)))
    n_tiles = n_pad // tile_n

    # MXU operand dtype (bf16 on v6e/v7x halves patch DMA bytes; f32 acc kept).
    patches = patches.astype(mxu_dtype)
    w_mix_c = w_mix.astype(mxu_dtype)

    patch_spec_kwargs = {}
    if n_tiles >= 3:
        # v5e: deeper buffering hides the big-K patch DMA behind the matmul.
        patch_spec_kwargs["pipeline_mode"] = pl.Buffered(3)
    patches_spec = pl.BlockSpec((Kp, tile_n), lambda t: (0, t), **patch_spec_kwargs)

    out = pl.pallas_call(
        _mixed_matmul_kernel,
        out_shape=jax.ShapeDtypeStruct((C_out, n_pad), jnp.float32),
        grid=(n_tiles,),
        in_specs=[
            pl.BlockSpec((C_out, Kp), lambda t: (0, 0)),       # mixed weight (grid-invariant)
            patches_spec,                                      # (Kp, tile_n) patch tile
        ],
        out_specs=pl.BlockSpec((C_out, tile_n), lambda t: (0, t)),
        compiler_params=pltpu.CompilerParams(
            dimension_semantics=("parallel",)),
        # TODO(synk): v7x — CORE_PARALLEL / core_map + vmem_limit_bytes for the
        # 64 MiB VMEM budget once tiles are production-sized.
    )(w_mix_c, patches)

    # Columns are ordered (b, h, w): (C_out, B*HW) -> (B, C_out, H, W).
    out = out[:, :N].reshape(C_out, B, H, W)
    return jnp.transpose(out, (1, 0, 2, 3))


# ---------------- parameter setup (glue, plain JAX) ----------------

def init_params(key, ops, in_planes, out_planes):
    """One shared (C_out, C_in, ks, ks) weight + (C_out,) bias per kernel-size key."""
    conv_weights, conv_bias = {}, {}
    for op in ops:
        if op[-1].isdigit():
            k3 = op[-3:]
            if k3 not in conv_weights:
                ks = int(op[-1])
                key, k1, k2 = jax.random.split(key, 3)
                conv_weights[k3] = jax.random.normal(
                    k1, (out_planes, in_planes, ks, ks), jnp.float32)
                conv_bias[k3] = jax.random.normal(k2, (out_planes,), jnp.float32)
    return conv_weights, conv_bias


def pack_branch_params(ops, conv_weights, conv_bias, in_planes, out_planes):
    """Pack each branch as one (C_out, Kp) matrix.

    Column k = (ky*KMAX + kx)*C_in + ci holds the conv tap (smaller kernels are
    zero-embedded in the KMAX x KMAX window), column K_raw holds the bias (it
    multiplies the constant-1 im2col row), remaining columns up to Kp are zero.
    Kp is padded to sublane granularity (16 covers both f32 and bf16 packing),
    NOT to 128 — Kp is the sublane axis of the patch tile.
    """
    kmax = max(int(op[-1]) for op in ops if op[-1].isdigit())
    k_raw = kmax * kmax * in_planes
    kp = _round_up(k_raw + 1, 16)
    packed = []
    for op in ops:
        # TODO(synk): the OPS / gt.PRIMITIVES dict is not provided in the source;
        # digit-suffixed primitives are implemented as the shared-weight stride-1
        # 'same' conv + bias (no BN / activation).  Non-linear primitives
        # (pool / skip / none) cannot be folded into the mixed weight and are
        # not instantiated here.
        assert op[-1].isdigit(), "only shared-weight conv branches supported"
        ks = int(op[-1])
        k3 = op[-3:]
        w = conv_weights[k3]                                    # (C_out, C_in, ks, ks)
        p = (kmax - ks) // 2
        w = jnp.pad(w, ((0, 0), (0, 0), (p, p), (p, p)))        # embed in KMAX x KMAX
        w = jnp.transpose(w, (0, 2, 3, 1)).reshape(out_planes, k_raw)
        w = jnp.concatenate(
            [w, conv_bias[k3][:, None],
             jnp.zeros((out_planes, kp - k_raw - 1), jnp.float32)], axis=1)
        packed.append(w)
    return jnp.stack(packed, 0), kmax                           # (num_branch, C_out, Kp)


# ---------------- pure-JAX reference for verification ----------------

def reference(x, op_weights, conv_weights, conv_bias, ops):
    outs = []
    for op in ops:
        k3 = op[-3:]
        w, b = conv_weights[k3], conv_bias[k3]
        y = lax.conv_general_dilated(
            x, w, (1, 1), "SAME",
            dimension_numbers=("NCHW", "OIHW", "NCHW"),
            precision=lax.Precision.HIGHEST) + b[None, :, None, None]
        outs.append(y)
    stacked = jnp.stack(outs, axis=1)                            # (B, nb, C_out, H, W)
    return (op_weights[None, :, None, None, None] * stacked).sum(axis=1)


if __name__ == "__main__":
    ops = ("conv_1x1", "conv_3x3", "conv_5x5")
    B, C_in, C_out, H, W = 2, 4, 8, 16, 16

    key = jax.random.PRNGKey(0)
    key, kx, ka = jax.random.split(key, 3)
    x = jax.random.normal(kx, (B, C_in, H, W), jnp.float32)
    # MixedOp forward: `weights` = one mixing coefficient per op (e.g. softmaxed alphas)
    op_weights = jax.nn.softmax(jax.random.normal(ka, (len(ops),), jnp.float32))

    conv_w, conv_b = init_params(key, ops, C_in, C_out)
    w_aug, kmax = pack_branch_params(ops, conv_w, conv_b, C_in, C_out)

    ref = reference(x, op_weights, conv_w, conv_b, ops)

    # f32 MXU operands (toy scale) — strict check against the lax.conv reference.
    out = mixed_op_forward(x, op_weights, w_aug, kmax)
    out = jax.block_until_ready(out)
    assert out.shape == (B, C_out, H, W), out.shape
    err = float(jnp.max(jnp.abs(out - ref)))
    assert jnp.allclose(out, ref, atol=1e-3, rtol=1e-3), err

    # bf16 MXU operands with f32 accumulation (v6e/v7x production path) — loose check.
    out_bf16 = jax.block_until_ready(
        mixed_op_forward(x, op_weights, w_aug, kmax, mxu_dtype=jnp.bfloat16))
    err_bf16 = float(jnp.max(jnp.abs(out_bf16 - ref)))
    assert jnp.allclose(out_bf16, ref, atol=0.75, rtol=5e-2), err_bf16

    print("KERNEL_OK")
</pallas_src>

<mosaic_0001>
module attributes {stable_mosaic.version = 11 : i64} {
  func.func @_mixed_matmul_kernel(%arg0: i32, %arg1: memref<8x112xf32, #tpu.memory_space<vmem>>, %arg2: memref<112x512xf32, #tpu.memory_space<vmem>>, %arg3: memref<8x512xf32, #tpu.memory_space<vmem>>) attributes {dimension_semantics = [#tpu.dimension_semantics<parallel>], iteration_bounds = array<i64: 1>, scalar_prefetch = 0 : i64, scratch_operands = 0 : i64, tpu.core_type = #tpu.core_type<tc>, window_params = [{pipeline_mode = #tpu.pipeline_mode<synchronous>, transform_indices = @transform_0, window_bounds = array<i64: 8, 112>}, {transform_indices = @transform_1, window_bounds = array<i64: 112, 512>}, {transform_indices = @transform_2, window_bounds = array<i64: 8, 512>}]} {
    %c0 = arith.constant 0 : index
    %c0_0 = arith.constant 0 : index
    %0 = vector.load %arg1[%c0, %c0_0] : memref<8x112xf32, #tpu.memory_space<vmem>>, vector<8x112xf32>
    %c0_1 = arith.constant 0 : index
    %c0_2 = arith.constant 0 : index
    %1 = vector.load %arg2[%c0_1, %c0_2] : memref<112x512xf32, #tpu.memory_space<vmem>>, vector<112x512xf32>
    %cst = arith.constant dense<0.000000e+00> : vector<8x512xf32>
    %2 = tpu.matmul %0, %1, %cst {dimension_numbers = #tpu.dot_dimension_numbers<[1], [0], [0], [1], [0, 0, 1, 1], [], []>} : vector<8x112xf32>, vector<112x512xf32>, vector<8x512xf32> -> vector<8x512xf32>
    %c0_3 = arith.constant 0 : index
    %c0_4 = arith.constant 0 : index
    %3 = vector.load %arg3[%c0_3, %c0_4] : memref<8x512xf32, #tpu.memory_space<vmem>>, vector<8x512xf32>
    tpu.vector_store %arg3[%c0_3, %c0_4], %2 {strides = array<i32>} : memref<8x512xf32, #tpu.memory_space<vmem>>, vector<8x512xf32>,
    return
  }
  func.func @transform_0(%arg0: i32) -> (i32, i32) {
    %c0_i32 = arith.constant 0 : i32
    %c0_i32_0 = arith.constant 0 : i32
    %c0_i32_1 = arith.constant 0 : i32
    return %c0_i32, %c0_i32_0 : i32, i32
  }
  func.func @transform_1(%arg0: i32) -> (i32, i32) {
    %c0_i32 = arith.constant 0 : i32
    %c0_i32_0 = arith.constant 0 : i32
    return %c0_i32, %arg0 : i32, i32
  }
  func.func @transform_2(%arg0: i32) -> (i32, i32) {
    %c0_i32 = arith.constant 0 : i32
    %c0_i32_0 = arith.constant 0 : i32
    return %c0_i32, %arg0 : i32, i32
  }
}

</mosaic_0001>

<llo_original>
// kernel: tpu_custom_call.1
$region0: #{tpu_custom_call.1}
  #allocation0 [shape = 'u32[]', space=smem, size = 0x4, offset = 0x4, fixed_abs, tag = 'smem constant byte address 0x4 - core index']
  #allocation1 [shape = 'u32[144,128]{1,0:T(1,128)}', space=vmem, size = 0x12000, scoped, tag = 'internal scratch']
  %s0 = inlined_call_operand.hbm [shape: f32[8,112], index: 0, kind: input, shape index: {}]
  %s1 = inlined_call_operand.hbm [shape: f32[112,512], index: 1, kind: input, shape index: {}]
  %s2 = inlined_call_operand.hbm [shape: f32[8,512], index: 2, kind: output, shape index: {}]
  %s3 = sld [smem:[#allocation0]]
  $region26: #{tpu_custom_call.1} parent=0
    _
  %s5 = ssub.s32 1, %s3
  %s6 = scalar_select 0, %s5, %s3
  $region1: #{tpu_custom_call.1} parent=0
    #allocation2 [shape = 'u8[4096]{0}', space=vmem, size = 0x1000, scoped, tag = 'input window, operand 0, single buffered']
    #allocation3 [shape = 's32[1]{0}', space=sflag, size = 0x4, scoped, tag = 'scoped memory for tpu_custom_call.1']
    #allocation4 [shape = 's32[1]{0}', space=sflag, size = 0x4, scoped, tag = 'scoped memory for tpu_custom_call.1']
    #allocation5 [shape = 'u8[229376]{0}', space=vmem, size = 0x38000, scoped, tag = 'input window, operand 1, single buffered']
    #allocation6 [shape = 's32[1]{0}', space=sflag, size = 0x4, scoped, tag = 'scoped memory for tpu_custom_call.1']
    #allocation7 [shape = 'u8[16384]{0}', space=vmem, size = 0x4000, scoped, tag = 'output window, operand 0, single buffered']
    %7 = vsyncpa [#allocation3], 0
    %8 = vsyncpa [#allocation6], 0
    %9 = vsyncpa [#allocation4], 0
    // Predicated region
    $region2: #{tpu_custom_call.1} parent=1 // pred_check
      _
    $region3: #{tpu_custom_call.1} parent=1 // pred_check_branch
      %11 = sbr.rel (0) target = $region5
    $region4: #{tpu_custom_call.1} parent=1 // pred_region
      %s13 = ssub.s32 128, 128
      %14 = vsyncadd [#allocation3], %s13
      %s16 = sshll.u32 [#allocation2], 4
      %s17 = int_to_ptr.vmem [resolvable:$true] %s16
      %19 = dma.hbm_to_vmem [thread:$0]  %s0, 128, %s17, [#allocation3]
    $region5: #{tpu_custom_call.1} parent=1 // pred_fallthru
      _
    // Predicated region
    $region6: #{tpu_custom_call.1} parent=1 // pred_check
      _
    $region7: #{tpu_custom_call.1} parent=1 // pred_check_branch
      %21 = sbr.rel (0) target = $region9
    $region8: #{tpu_custom_call.1} parent=1 // pred_region
      %s23 = ssub.s32 7168, 7168
      %24 = vsyncadd [#allocation6], %s23
      %s25 = sshll.u32 [#allocation5], 4
      %s26 = int_to_ptr.vmem [resolvable:$true] %s25
      %31 = dma.hbm_to_vmem [thread:$0]  %s1, 7168, %s26, [#allocation6], 512, 512, 32
    $region9: #{tpu_custom_call.1} parent=1 // pred_fallthru
      _
    // Predicated region
    $region10: #{tpu_custom_call.1} parent=1 // pred_check
      _
    $region11: #{tpu_custom_call.1} parent=1 // pred_check_branch
      %33 = sbr.rel (0) target = $region13
    $region12: #{tpu_custom_call.1} parent=1 // pred_region
      %34 = dma.done [#allocation3], 128
    $region13: #{tpu_custom_call.1} parent=1 // pred_fallthru
      _
    // Predicated region
    $region14: #{tpu_custom_call.1} parent=1 // pred_check
      _
    $region15: #{tpu_custom_call.1} parent=1 // pred_check_branch
      %36 = sbr.rel (0) target = $region17
    $region16: #{tpu_custom_call.1} parent=1 // pred_region
      %37 = dma.done [#allocation6], 7168
    $region17: #{tpu_custom_call.1} parent=1 // pred_fallthru
      _
    %v38 = vld [vmem:[#allocation2] sm:$0xff]
    %v39 = vld [vmem:[#allocation5] sm:$0xff]
    %v40 = vld [vmem:[#allocation5 + $0x8] sm:$0xff]
    %v41 = vld [vmem:[#allocation5 + $0x10] sm:$0xff]
    %v42 = vld [vmem:[#allocation5 + $0x18] sm:$0xff]
    %v43 = vld [vmem:[#allocation5 + $0x20] sm:$0xff]
    %v44 = vld [vmem:[#allocation5 + $0x28] sm:$0xff]
    %v45 = vld [vmem:[#allocation5 + $0x30] sm:$0xff]
    %v46 = vld [vmem:[#allocation5 + $0x38] sm:$0xff]
    %v47 = vld [vmem:[#allocation5 + $0x40] sm:$0xff]
    %v48 = vld [vmem:[#allocation5 + $0x48] sm:$0xff]
    %v49 = vld [vmem:[#allocation5 + $0x50] sm:$0xff]
    %v50 = vld [vmem:[#allocation5 + $0x58] sm:$0xff]
    %v51 = vld [vmem:[#allocation5 + $0x60] sm:$0xff]
    %v52 = vld [vmem:[#allocation5 + $0x68] sm:$0xff]
    %v53 = vld [vmem:[#allocation5 + $0x70] sm:$0xff]
    %v54 = vld [vmem:[#allocation5 + $0x78] sm:$0xff]
    %v55 = vld [vmem:[#allocation5 + $0x80] sm:$0xff]
    %v56 = vld [vmem:[#allocation5 + $0x88] sm:$0xff]
    %v57 = vld [vmem:[#allocation5 + $0x90] sm:$0xff]
    %v58 = vld [vmem:[#allocation5 + $0x98] sm:$0xff]
    %v59 = vld [vmem:[#allocation5 + $0xa0] sm:$0xff]
    %v60 = vld [vmem:[#allocation5 + $0xa8] sm:$0xff]
    %v61 = vld [vmem:[#allocation5 + $0xb0] sm:$0xff]
    %v62 = vld [vmem:[#allocation5 + $0xb8] sm:$0xff]
    %v63 = vld [vmem:[#allocation5 + $0xc0] sm:$0xff]
    %v64 = vld [vmem:[#allocation5 + $0xc8] sm:$0xff]
    %v65 = vld [vmem:[#allocation5 + $0xd0] sm:$0xff]
    %v66 = vld [vmem:[#allocation5 + $0xd8] sm:$0xff]
    %v67 = vld [vmem:[#allocation5 + $0xe0] sm:$0xff]
    %v68 = vld [vmem:[#allocation5 + $0xe8] sm:$0xff]
    %v69 = vld [vmem:[#allocation5 + $0xf0] sm:$0xff]
    %v70 = vld [vmem:[#allocation5 + $0xf8] sm:$0xff]
    %v71 = vld [vmem:[#allocation5 + $0x100] sm:$0xff]
    %v72 = vld [vmem:[#allocation5 + $0x108] sm:$0xff]
    %v73 = vld [vmem:[#allocation5 + $0x110] sm:$0xff]
    %v74 = vld [vmem:[#allocation5 + $0x118] sm:$0xff]
    %v75 = vld [vmem:[#allocation5 + $0x120] sm:$0xff]
    %v76 = vld [vmem:[#allocation5 + $0x128] sm:$0xff]
    %v77 = vld [vmem:[#allocation5 + $0x130] sm:$0xff]
    %v78 = vld [vmem:[#allocation5 + $0x138] sm:$0xff]
    %v79 = vld [vmem:[#allocation5 + $0x140] sm:$0xff]
    %v80 = vld [vmem:[#allocation5 + $0x148] sm:$0xff]
    %v81 = vld [vmem:[#allocation5 + $0x150] sm:$0xff]
    %v82 = vld [vmem:[#allocation5 + $0x158] sm:$0xff]
    %v83 = vld [vmem:[#allocation5 + $0x160] sm:$0xff]
    %v84 = vld [vmem:[#allocation5 + $0x168] sm:$0xff]
    %v85 = vld [vmem:[#allocation5 + $0x170] sm:$0xff]
    %v86 = vld [vmem:[#allocation5 + $0x178] sm:$0xff]
    %v87 = vld [vmem:[#allocation5 + $0x180] sm:$0xff]
    %v88 = vld [vmem:[#allocation5 + $0x188] sm:$0xff]
    %v89 = vld [vmem:[#allocation5 + $0x190] sm:$0xff]
    %v90 = vld [vmem:[#allocation5 + $0x198] sm:$0xff]
    %v91 = vld [vmem:[#allocation5 + $0x1a0] sm:$0xff]
    %v92 = vld [vmem:[#allocation5 + $0x1a8] sm:$0xff]
    %v93 = vld [vmem:[#allocation5 + $0x1b0] sm:$0xff]
    %v94 = vld [vmem:[#allocation5 + $0x1b8] sm:$0xff]
    %vm95 = vcmask 916480
    %v97 = vsel %vm95, %v38, 0
    %99 = vmatprep.subr.mxu0 %v40
    %100 = vmatpush1.msra.mxu0 %v39
    %101 = vmatprep.subr.mxu0 %v44
    %102 = vmatpush1.msra.mxu0 %v43
    %103 = vmatprep.subr.mxu0 %v48
    %104 = vmatpush1.msra.mxu0 %v47
    %105 = vmatprep.subr.mxu0 %v52
    %106 = vmatpush1.msra.mxu0 %v51
    %107 = vmatprep.subr.mxu0 %v56
    %108 = vmatpush1.msra.mxu0 %v55
    %109 = vmatprep.subr.mxu0 %v60
    %110 = vmatpush1.msra.mxu0 %v59
    %111 = vmatprep.subr.mxu0 %v64
    %112 = vmatpush1.msra.mxu0 %v63
    %113 = vmatprep.subr.mxu0 %v68
    %114 = vmatpush1.msra.mxu0 %v67
    %115 = vmatprep.subr.mxu0 %v72
    %116 = vmatpush1.msra.mxu0 %v71
    %117 = vmatprep.subr.mxu0 %v76
    %118 = vmatpush1.msra.mxu0 %v75
    %119 = vmatprep.subr.mxu0 %v80
    %120 = vmatpush1.msra.mxu0 %v79
    %121 = vmatprep.subr.mxu0 %v84
    %122 = vmatpush1.msra.mxu0 %v83
    %123 = vmatprep.subr.mxu0 %v88
    %124 = vmatpush1.msra.mxu0 %v87
    %125 = vmatprep.subr.mxu0 %v92
    %126 = vmatpush1.msra.mxu0 %v91
    %127 = vmatprep.subr.mxu0 0.0
    %128 = vmatpush1.msra.mxu0 0.0
    %129 = vmatprep.subr.mxu0 0.0
    %130 = vmatpush1.msra.mxu0 0.0
    %131 = vmatprep.subr.mxu0 0.0
    %132 = vmatpush1.msra.mxu0 0.0
    %133 = vmatprep.subr.mxu0 0.0
    %134 = vmatpush1.msra.mxu0 0.0
    %135 = vmatprep.subr.mxu0 0.0
    %136 = vmatpush1.msra.mxu0 0.0
    %137 = vmatprep.subr.mxu0 0.0
    %138 = vmatpush1.msra.mxu0 0.0
    %139 = vmatprep.subr.mxu0 0.0
    %140 = vmatpush1.msra.mxu0 0.0
    %141 = vmatprep.subr.mxu0 0.0
    %142 = vmatpush1.msra.mxu0 0.0
    %143 = vmatprep.subr.mxu0 0.0
    %144 = vmatpush1.msra.mxu0 0.0
    %145 = vmatprep.subr.mxu0 0.0
    %146 = vmatpush1.msra.mxu0 0.0
    %147 = vmatprep.subr.mxu0 0.0
    %148 = vmatpush1.msra.mxu0 0.0
    %149 = vmatprep.subr.mxu0 0.0
    %150 = vmatpush1.msra.mxu0 0.0
    %151 = vmatprep.subr.mxu0 0.0
    %152 = vmatpush1.msra.mxu0 0.0
    %153 = vmatprep.subr.mxu0 0.0
    %154 = vmatpush1.msra.mxu0 0.0
    %155 = vmatprep.subr.mxu0 0.0
    %156 = vmatpush1.msra.mxu0 0.0
    %157 = vmatprep.subr.mxu0 0.0
    %158 = vmatpush1.msra.mxu0 0.0
    %159 = vmatprep.subr.mxu0 0.0
    %160 = vmatpush1.msra.mxu0 0.0
    %161 = vmatprep.subr.mxu0 0.0
    %162 = vmatpush1.msra.mxu0 0.0
    %163 = vmatprep.mubr.f32.mxu0 0.0
    %164 = vmatmul.mubr.f32.gmra.mrb[0].mxu0 %v97
    %v165 = vpop.f32.mrb[0].mxu0
    %v166 = vadd.f32 0.0, %v165
    %v167 = vpop.f32.mrb[0].mxu0
    %v168 = vadd.f32 0.0, %v167
    %169 = vdwg.mxu0
    %170 = vmatprep.subr.mxu0 %v42
    %171 = vmatpush1.msra.mxu0 %v41
    %172 = vmatprep.subr.mxu0 %v46
    %173 = vmatpush1.msra.mxu0 %v45
    %174 = vmatprep.subr.mxu0 %v50
    %175 = vmatpush1.msra.mxu0 %v49
    %176 = vmatprep.subr.mxu0 %v54
    %177 = vmatpush1.msra.mxu0 %v53
    %178 = vmatprep.subr.mxu0 %v58
    %179 = vmatpush1.msra.mxu0 %v57
    %180 = vmatprep.subr.mxu0 %v62
    %181 = vmatpush1.msra.mxu0 %v61
    %182 = vmatprep.subr.mxu0 %v66
    %183 = vmatpush1.msra.mxu0 %v65
    %184 = vmatprep.subr.mxu0 %v70
    %185 = vmatpush1.msra.mxu0 %v69
    %186 = vmatprep.subr.mxu0 %v74
    %187 = vmatpush1.msra.mxu0 %v73
    %188 = vmatprep.subr.mxu0 %v78
    %189 = vmatpush1.msra.mxu0 %v77
    %190 = vmatprep.subr.mxu0 %v82
    %191 = vmatpush1.msra.mxu0 %v81
    %192 = vmatprep.subr.mxu0 %v86
    %193 = vmatpush1.msra.mxu0 %v85
    %194 = vmatprep.subr.mxu0 %v90
    %195 = vmatpush1.msra.mxu0 %v89
    %196 = vmatprep.subr.mxu0 %v94
    %197 = vmatpush1.msra.mxu0 %v93
    %198 = vmatprep.subr.mxu0 0.0
    %199 = vmatpush1.msra.mxu0 0.0
    %200 = vmatprep.subr.mxu0 0.0
    %201 = vmatpush1.msra.mxu0 0.0
    %202 = vmatprep.subr.mxu0 0.0
    %203 = vmatpush1.msra.mxu0 0.0
    %204 = vmatprep.subr.mxu0 0.0
    %205 = vmatpush1.msra.mxu0 0.0
    %206 = vmatprep.subr.mxu0 0.0
    %207 = vmatpush1.msra.mxu0 0.0
    %208 = vmatprep.subr.mxu0 0.0
    %209 = vmatpush1.msra.mxu0 0.0
    %210 = vmatprep.subr.mxu0 0.0
    %211 = vmatpush1.msra.mxu0 0.0
    %212 = vmatprep.subr.mxu0 0.0
    %213 = vmatpush1.msra.mxu0 0.0
    %214 = vmatprep.subr.mxu0 0.0
    %215 = vmatpush1.msra.mxu0 0.0
    %216 = vmatprep.subr.mxu0 0.0
    %217 = vmatpush1.msra.mxu0 0.0
    %218 = vmatprep.subr.mxu0 0.0
    %219 = vmatpush1.msra.mxu0 0.0
    %220 = vmatprep.subr.mxu0 0.0
    %221 = vmatpush1.msra.mxu0 0.0
    %222 = vmatprep.subr.mxu0 0.0
    %223 = vmatpush1.msra.mxu0 0.0
    %224 = vmatprep.subr.mxu0 0.0
    %225 = vmatpush1.msra.mxu0 0.0
    %226 = vmatprep.subr.mxu0 0.0
    %227 = vmatpush1.msra.mxu0 0.0
    %228 = vmatprep.subr.mxu0 0.0
    %229 = vmatpush1.msra.mxu0 0.0
    %230 = vmatprep.subr.mxu0 0.0
    %231 = vmatpush1.msra.mxu0 0.0
    %232 = vmatprep.subr.mxu0 0.0
    %233 = vmatpush1.msra.mxu0 0.0
    %234 = vmatprep.mubr.f32.mxu0 0.0
    %235 = vmatmul.mubr.f32.gmra.mrb[0].mxu0 %v97
    %v236 = vpop.f32.mrb[0].mxu0
    %v237 = vadd.f32 0.0, %v236
    %v238 = vpop.f32.mrb[0].mxu0
    %v239 = vadd.f32 0.0, %v238
    %240 = vdwg.mxu0
    %241 = vst [vmem:[#allocation7] sm:$0xff] %v166
    %242 = vst [vmem:[#allocation7 + $0x8] sm:$0xff] %v168
    %243 = vst [vmem:[#allocation7 + $0x10] sm:$0xff] %v237
    %244 = vst [vmem:[#allocation7 + $0x18] sm:$0xff] %v239
    // Predicated region
    $region18: #{tpu_custom_call.1} parent=1 // pred_check
      _
    $region19: #{tpu_custom_call.1} parent=1 // pred_check_branch
      %246 = sbr.rel (0) target = $region21
    $region20: #{tpu_custom_call.1} parent=1 // pred_region
      %s248 = ssub.s32 512, 512
      %249 = vsyncadd [#allocation4], %s248
      %s251 = sshll.u32 [#allocation7], 4
      %s252 = int_to_ptr.vmem [resolvable:$true] %s251
      %254 = dma.vmem_to_hbm [thread:$0]  %s252, 512, %s2, [#allocation4]
    $region21: #{tpu_custom_call.1} parent=1 // pred_fallthru
      _
    // Predicated region
    $region22: #{tpu_custom_call.1} parent=1 // pred_check
      _
    $region23: #{tpu_custom_call.1} parent=1 // pred_check_branch
      %256 = sbr.rel (0) target = $region25
    $region24: #{tpu_custom_call.1} parent=1 // pred_region
      %257 = dma.done [#allocation4], 512
    $region25: #{tpu_custom_call.1} parent=1 // pred_fallthru
      _
    %258 = vsyncpa [#allocation3], 1
    %259 = vsyncpa [#allocation6], 1
    %260 = vsyncpa [#allocation4], 1

</llo_original>
